<compile_context>
chip_gen: v5e
topology: v5e:2x2
jax: 0.10.0
libtpu: 0.0.40
codegen_flags: <defaults>
</compile_context>

<pallas_src>
import functools

import jax
import jax.numpy as jnp
from jax.experimental import pallas as pl
from jax.experimental.pallas import tpu as pltpu


_SUBLANE = {4: 8, 2: 16, 1: 32}   # second-minor alignment per itemsize (f32 / bf16 / int8)


def _round_up(x, m):
    return (x + m - 1) // m * m


def _fold_rows(x_ref, acc_ref, valid, chunk, sub):
    """Fold max over x_ref[:valid, :] (native dtype) into the (1, M) f32 acc_ref.

    `valid`, `chunk`, `sub` are Python ints, so everything here is statically
    unrolled: a handful of sublane-aligned ref-slice reductions plus, only when
    `valid` is not a multiple of the sublane group, one -inf-masked (sub, M) group.
    """
    part = None

    aligned = (valid // sub) * sub
    for s in range(0, aligned, chunk):
        e = min(s + chunk, aligned)
        cm = jnp.max(x_ref[s:e, :], axis=0, keepdims=True)            # (1, M) native dtype
        part = cm if part is None else jnp.maximum(part, cm)

    rem = valid - aligned
    if rem:
        grp = x_ref[aligned:aligned + sub, :]                          # aligned (sub, M) group
        rid = jax.lax.broadcasted_iota(jnp.int32, grp.shape, 0)
        grp = jnp.where(rid < rem, grp, jnp.array(-jnp.inf, dtype=grp.dtype))
        gm = jnp.max(grp, axis=0, keepdims=True)
        part = gm if part is None else jnp.maximum(part, gm)

    acc_ref[...] = jnp.maximum(acc_ref[...], part.astype(jnp.float32))


def emb_max_kernel(x_ref, w_ref, b_ref, yprob_ref, yhat_ref, acc_ref, *,
                   n_instances, tile_n, chunk, sub):
    # x_ref  : (TN, M) streamed instance tile (native dtype)
    # w_ref  : (1, M)  classifier weight row (resident; block index never changes)
    # b_ref  : (1, 1)  classifier bias (SMEM scalar)
    # acc_ref: (1, M)  f32 running max over instances (grid-resident VMEM scratch)
    pid = pl.program_id(0)
    last = pl.num_programs(0) - 1

    @pl.when(pid == 0)
    def _init():
        acc_ref[...] = jnp.full(acc_ref.shape, -jnp.inf, acc_ref.dtype)

    tail_valid = n_instances % tile_n
    if tail_valid == 0:
        # N divides the tile evenly: every step takes the cheap unmasked path.
        _fold_rows(x_ref, acc_ref, tile_n, chunk, sub)
    else:
        # Only the single ragged tail tile pays for any masking at all.
        @pl.when(pid != last)
        def _full_tile():
            _fold_rows(x_ref, acc_ref, tile_n, chunk, sub)

        @pl.when(pid == last)
        def _tail_tile():
            _fold_rows(x_ref, acc_ref, tail_valid, chunk, sub)

    @pl.when(pid == last)
    def _finalize():
        z = acc_ref[...]                                               # (1, M) f32
        # Linear(M, 1): elementwise multiply (VPU) + cross-lane sum (XLU) + bias.
        # Deliberately NOT an MXU matmul (it would use 1/128 of the MXU rows).
        logit = jnp.sum(z * w_ref[...], axis=1, keepdims=True) + b_ref[0, 0]
        y_prob = jax.nn.sigmoid(logit)                                 # EUP
        yprob_ref[...] = y_prob.astype(yprob_ref.dtype)
        yhat_ref[...] = (y_prob >= 0.5).astype(yhat_ref.dtype)


def _tpu_vmem_capacity_bytes():
    try:
        return int(pltpu.get_tpu_info().vmem_capacity_bytes)
    except Exception:
        return 64 << 20            # conservative default (v7x per-TensorCore VMEM)


def _choose_tile_n(n, m, itemsize, sub, vmem_budget):
    """Rows per streamed tile: multiple of `sub`, ~12-16 MiB per buffer (two in-flight
    buffers + scratch must fit the VMEM budget), never larger than one covering block."""
    row_bytes = m * itemsize
    target = min(16 << 20, max(2 << 20, (vmem_budget - (8 << 20)) // 3))
    rows = max(sub, (target // row_bytes) // sub * sub)
    return int(min(rows, _round_up(n, sub)))


def _choose_chunk(tile_n, m, itemsize, sub):
    """Rows per in-kernel reduction chunk (~4 MiB): bounds any value the reduce might
    materialise and keeps the per-chunk intra-vreg finish <3% of the VPU work."""
    rows = max(sub, ((4 << 20) // (m * itemsize)) // sub * sub)
    return int(min(rows, tile_n))


def emb_max_forward(x, weight, bias, *, tile_n=None):
    """x: (1, N, M); weight: (1, M); bias: (1,) -> (Y_prob (1,1) f32, Y_hat (1,1) f32).

    The bag is streamed in its native dtype (float32 or bfloat16); other dtypes are
    cast to float32. The accumulator and classifier always run in float32.
    """
    x2d = jnp.squeeze(x, axis=0)                                       # (N, M)
    if x2d.dtype.name not in ("float32", "bfloat16"):
        x2d = x2d.astype(jnp.float32)
    N, M = x2d.shape
    if N < 1:
        raise ValueError("Emb_max requires at least one instance in the bag.")
    itemsize = x2d.dtype.itemsize
    sub = _SUBLANE[itemsize]

    phys_vmem = _tpu_vmem_capacity_bytes()
    vmem_budget = (phys_vmem * 3) // 4            # ~96 MiB on v5e/v6e, ~48 MiB on v7x

    if tile_n is None:
        tile_n = _choose_tile_n(N, M, itemsize, sub, vmem_budget)
    else:
        tile_n = max(sub, _round_up(int(tile_n), sub))                 # (8,128) block rule
        tile_n = min(tile_n, _round_up(N, sub))
    chunk = _choose_chunk(tile_n, M, itemsize, sub)
    grid_n = pl.cdiv(N, tile_n)

    w_row = weight.reshape(1, M).astype(jnp.float32)
    b = bias.reshape(1, 1).astype(jnp.float32)

    # Two in-flight streamed buffers + one reduce chunk + accumulator/weight + headroom,
    # clamped to the physical per-core VMEM of this TPU generation.
    tile_bytes = tile_n * M * itemsize
    chunk_bytes = chunk * M * itemsize
    vmem_bytes = 2 * tile_bytes + chunk_bytes + 2 * M * 4 + (4 << 20)
    vmem_bytes = int(min(max(vmem_bytes, 8 << 20), (phys_vmem * 9) // 10))

    kernel = functools.partial(emb_max_kernel, n_instances=N, tile_n=tile_n,
                               chunk=chunk, sub=sub)

    y_prob, y_hat = pl.pallas_call(
        kernel,
        out_shape=(
            jax.ShapeDtypeStruct((1, 1), jnp.float32),                 # Y_prob
            jax.ShapeDtypeStruct((1, 1), jnp.float32),                 # Y_hat
        ),
        grid_spec=pltpu.PrefetchScalarGridSpec(
            num_scalar_prefetch=0,
            grid=(grid_n,),
            in_specs=[
                pl.BlockSpec((tile_n, M), lambda n: (n, 0)),           # streamed bag tiles
                pl.BlockSpec((1, M), lambda n: (0, 0)),                # weight row (fixed block)
                pl.BlockSpec(memory_space=pltpu.SMEM),                 # bias scalar
            ],
            out_specs=(
                pl.BlockSpec((1, 1), lambda n: (0, 0)),
                pl.BlockSpec((1, 1), lambda n: (0, 0)),
            ),
            scratch_shapes=[pltpu.VMEM((1, M), jnp.float32)],          # running max
        ),
        compiler_params=pltpu.CompilerParams(
            dimension_semantics=("arbitrary",),                        # reduction axis
            vmem_limit_bytes=vmem_bytes,
        ),
    )(x2d, w_row, b)
    return y_prob, y_hat


def init_params(M, key):
    # Deterministic init mimicking nn.Linear default: U(-1/sqrt(M), 1/sqrt(M)).
    kw, kb = jax.random.split(key)
    bound = 1.0 / jnp.sqrt(jnp.float32(M))
    weight = jax.random.uniform(kw, (1, M), jnp.float32, -bound, bound)
    bias = jax.random.uniform(kb, (1,), jnp.float32, -bound, bound)
    return weight, bias


if __name__ == "__main__":
    key = jax.random.PRNGKey(0)
    k_x, k_p = jax.random.split(key)

    N, M = 200, 1024                      # module default M=1024; small bag of 200 instances
    x = jax.random.normal(k_x, (1, N, M), jnp.float32)
    weight, bias = init_params(M, k_p)

    # Pure-JAX reference.
    z_ref = jnp.max(jnp.squeeze(x, 0), axis=0, keepdims=True)
    logit_ref = z_ref @ weight.T + bias
    y_prob_ref = jax.nn.sigmoid(logit_ref)
    y_hat_ref = (y_prob_ref >= 0.5).astype(jnp.float32)

    # 1) Multi-tile streaming path with a ragged tail (3 full tiles + 8 valid rows).
    y_prob, y_hat = emb_max_forward(x, weight, bias, tile_n=64)
    jax.block_until_ready((y_prob, y_hat))
    assert jnp.allclose(y_prob, y_prob_ref, atol=1e-6, rtol=1e-6), (y_prob, y_prob_ref)
    assert jnp.array_equal(y_hat, y_hat_ref), (y_hat, y_hat_ref)

    # 2) Auto-tiled single-block path.
    y_prob2, y_hat2 = emb_max_forward(x, weight, bias)
    jax.block_until_ready((y_prob2, y_hat2))
    assert jnp.allclose(y_prob2, y_prob_ref, atol=1e-6, rtol=1e-6)
    assert jnp.array_equal(y_hat2, y_hat_ref)

    # 3) Native-dtype streaming path (bf16 bag streamed as-is, f32 accumulator/classifier).
    Nb = 192
    xb = jax.random.normal(k_x, (1, Nb, M), jnp.float32).astype(jnp.bfloat16)
    y_prob3, y_hat3 = emb_max_forward(xb, weight, bias, tile_n=64)
    jax.block_until_ready((y_prob3, y_hat3))
    zb = jnp.max(jnp.squeeze(xb, 0), axis=0, keepdims=True).astype(jnp.float32)
    y_prob3_ref = jax.nn.sigmoid(zb @ weight.T + bias)
    assert jnp.allclose(y_prob3, y_prob3_ref, atol=1e-5, rtol=1e-5), (y_prob3, y_prob3_ref)
    assert jnp.array_equal(y_hat3, (y_prob3 >= 0.5).astype(jnp.float32))

    print("KERNEL_OK")
</pallas_src>

<mosaic_0001>
module attributes {stable_mosaic.version = 11 : i64} {
  func.func @emb_max_kernel(%arg0: i32, %arg1: memref<64x1024xf32, #tpu.memory_space<vmem>>, %arg2: memref<1x1024xf32, #tpu.memory_space<vmem>>, %arg3: memref<1x1xf32, #tpu.memory_space<smem>>, %arg4: memref<1x1xf32, #tpu.memory_space<vmem>>, %arg5: memref<1x1xf32, #tpu.memory_space<vmem>>, %arg6: memref<1x1024xf32, #tpu.memory_space<vmem>>) attributes {dimension_semantics = [#tpu.dimension_semantics<arbitrary>], iteration_bounds = array<i64: 4>, scalar_prefetch = 0 : i64, scratch_operands = 1 : i64, tpu.core_type = #tpu.core_type<tc>, window_params = [{transform_indices = @transform_0, window_bounds = array<i64: 64, 1024>}, {pipeline_mode = #tpu.pipeline_mode<synchronous>, transform_indices = @transform_1, window_bounds = array<i64: 1, 1024>}, {transform_indices = @transform_2, window_bounds = array<i64: 1, 1>}, {pipeline_mode = #tpu.pipeline_mode<synchronous>, transform_indices = @transform_3, window_bounds = array<i64: 1, 1>}, {pipeline_mode = #tpu.pipeline_mode<synchronous>, transform_indices = @transform_4, window_bounds = array<i64: 1, 1>}]} {
    %c0_i32 = arith.constant 0 : i32
    %0 = arith.cmpi eq, %arg0, %c0_i32 : i32
    %1 = arith.extui %0 : i1 to i32
    %c0_i32_0 = arith.constant 0 : i32
    %2 = arith.cmpi ne, %1, %c0_i32_0 : i32
    scf.if %2 {
      %cst = arith.constant 0xFF800000 : f32
      %12 = vector.broadcast %cst : f32 to vector<1x1024xf32>
      %c0 = arith.constant 0 : index
      %c0_6 = arith.constant 0 : index
      %13 = vector.load %arg6[%c0, %c0_6] : memref<1x1024xf32, #tpu.memory_space<vmem>>, vector<1x1024xf32>
      tpu.vector_store %arg6[%c0, %c0_6], %12 {strides = array<i32>} : memref<1x1024xf32, #tpu.memory_space<vmem>>, vector<1x1024xf32>,
    } else {
    }
    %c3_i32 = arith.constant 3 : i32
    %3 = arith.cmpi ne, %arg0, %c3_i32 : i32
    %4 = arith.extui %3 : i1 to i32
    %c0_i32_1 = arith.constant 0 : i32
    %5 = arith.cmpi ne, %4, %c0_i32_1 : i32
    scf.if %5 {
      %c0 = arith.constant 0 : index
      %c0_6 = arith.constant 0 : index
      %12 = vector.load %arg1[%c0, %c0_6] : memref<64x1024xf32, #tpu.memory_space<vmem>>, vector<64x1024xf32>
      %cst = arith.constant dense<0xFF800000> : vector<1024xf32>
      %13 = vector.multi_reduction <maximumf>, %12, %cst [0] : vector<64x1024xf32> to vector<1024xf32>
      %14 = vector.shape_cast %13 : vector<1024xf32> to vector<1x1024xf32>
      %c0_7 = arith.constant 0 : index
      %c0_8 = arith.constant 0 : index
      %15 = vector.load %arg6[%c0_7, %c0_8] : memref<1x1024xf32, #tpu.memory_space<vmem>>, vector<1x1024xf32>
      %16 = arith.maximumf %15, %14 : vector<1x1024xf32>
      %c0_9 = arith.constant 0 : index
      %c0_10 = arith.constant 0 : index
      %17 = vector.load %arg6[%c0_9, %c0_10] : memref<1x1024xf32, #tpu.memory_space<vmem>>, vector<1x1024xf32>
      tpu.vector_store %arg6[%c0_9, %c0_10], %16 {strides = array<i32>} : memref<1x1024xf32, #tpu.memory_space<vmem>>, vector<1x1024xf32>,
    } else {
    }
    %c3_i32_2 = arith.constant 3 : i32
    %6 = arith.cmpi eq, %arg0, %c3_i32_2 : i32
    %7 = arith.extui %6 : i1 to i32
    %c0_i32_3 = arith.constant 0 : i32
    %8 = arith.cmpi ne, %7, %c0_i32_3 : i32
    scf.if %8 {
      %c0 = arith.constant 0 : index
      %c0_6 = arith.constant 0 : index
      %12 = vector.load %arg1[%c0, %c0_6] : memref<64x1024xf32, #tpu.memory_space<vmem>>, vector<8x1024xf32>
      %cst = arith.constant dense<0xFF800000> : vector<1024xf32>
      %13 = vector.multi_reduction <maximumf>, %12, %cst [0] : vector<8x1024xf32> to vector<1024xf32>
      %14 = vector.shape_cast %13 : vector<1024xf32> to vector<1x1024xf32>
      %c0_7 = arith.constant 0 : index
      %c0_8 = arith.constant 0 : index
      %15 = vector.load %arg6[%c0_7, %c0_8] : memref<1x1024xf32, #tpu.memory_space<vmem>>, vector<1x1024xf32>
      %16 = arith.maximumf %15, %14 : vector<1x1024xf32>
      %c0_9 = arith.constant 0 : index
      %c0_10 = arith.constant 0 : index
      %17 = vector.load %arg6[%c0_9, %c0_10] : memref<1x1024xf32, #tpu.memory_space<vmem>>, vector<1x1024xf32>
      tpu.vector_store %arg6[%c0_9, %c0_10], %16 {strides = array<i32>} : memref<1x1024xf32, #tpu.memory_space<vmem>>, vector<1x1024xf32>,
    } else {
    }
    %c3_i32_4 = arith.constant 3 : i32
    %9 = arith.cmpi eq, %arg0, %c3_i32_4 : i32
    %10 = arith.extui %9 : i1 to i32
    %c0_i32_5 = arith.constant 0 : i32
    %11 = arith.cmpi ne, %10, %c0_i32_5 : i32
    scf.if %11 {
      %c0 = arith.constant 0 : index
      %c0_6 = arith.constant 0 : index
      %12 = vector.load %arg6[%c0, %c0_6] : memref<1x1024xf32, #tpu.memory_space<vmem>>, vector<1x1024xf32>
      %c0_7 = arith.constant 0 : index
      %c0_8 = arith.constant 0 : index
      %13 = vector.load %arg2[%c0_7, %c0_8] : memref<1x1024xf32, #tpu.memory_space<vmem>>, vector<1x1024xf32>
      %14 = arith.mulf %12, %13 : vector<1x1024xf32>
      %cst = arith.constant dense<0.000000e+00> : vector<1xf32>
      %15 = vector.multi_reduction <add>, %14, %cst [1] : vector<1x1024xf32> to vector<1xf32>
      %16 = vector.shape_cast %15 : vector<1xf32> to vector<1x1xf32>
      %c0_9 = arith.constant 0 : index
      %c0_10 = arith.constant 0 : index
      %17 = memref.load %arg3[%c0_9, %c0_10] : memref<1x1xf32, #tpu.memory_space<smem>>
      %18 = vector.broadcast %17 : f32 to vector<1x1xf32>
      %19 = arith.addf %16, %18 : vector<1x1xf32>
      %20 = arith.negf %19 : vector<1x1xf32>
      %21 = math.exp %20 : vector<1x1xf32>
      %cst_11 = arith.constant 1.000000e+00 : f32
      %22 = vector.broadcast %cst_11 : f32 to vector<1x1xf32>
      %23 = arith.addf %22, %21 : vector<1x1xf32>
      %24 = arith.divf %22, %23 : vector<1x1xf32>
      %c0_12 = arith.constant 0 : index
      %c0_13 = arith.constant 0 : index
      %25 = vector.load %arg4[%c0_12, %c0_13] : memref<1x1xf32, #tpu.memory_space<vmem>>, vector<1x1xf32>
      tpu.vector_store %arg4[%c0_12, %c0_13], %24 {strides = array<i32>} : memref<1x1xf32, #tpu.memory_space<vmem>>, vector<1x1xf32>,
      %cst_14 = arith.constant 5.000000e-01 : f32
      %26 = vector.broadcast %cst_14 : f32 to vector<1x1xf32>
      %27 = arith.cmpf oge, %24, %26 : vector<1x1xf32>
      %28 = arith.extui %27 : vector<1x1xi1> to vector<1x1xi32>
      %29 = arith.sitofp %28 : vector<1x1xi32> to vector<1x1xf32>
      %c0_15 = arith.constant 0 : index
      %c0_16 = arith.constant 0 : index
      %30 = vector.load %arg5[%c0_15, %c0_16] : memref<1x1xf32, #tpu.memory_space<vmem>>, vector<1x1xf32>
      tpu.vector_store %arg5[%c0_15, %c0_16], %29 {strides = array<i32>} : memref<1x1xf32, #tpu.memory_space<vmem>>, vector<1x1xf32>,
    } else {
    }
    return
  }
  func.func @transform_0(%arg0: i32) -> (i32, i32) {
    %c0_i32 = arith.constant 0 : i32
    %c0_i32_0 = arith.constant 0 : i32
    return %arg0, %c0_i32 : i32, i32
  }
  func.func @transform_1(%arg0: i32) -> (i32, i32) {
    %c0_i32 = arith.constant 0 : i32
    %c0_i32_0 = arith.constant 0 : i32
    %c0_i32_1 = arith.constant 0 : i32
    return %c0_i32, %c0_i32_0 : i32, i32
  }
  func.func @transform_2(%arg0: i32) -> (i32, i32) {
    %c0_i32 = arith.constant 0 : i32
    %c0_i32_0 = arith.constant 0 : i32
    %c0_i32_1 = arith.constant 0 : i32
    return %c0_i32, %c0_i32_0 : i32, i32
  }
  func.func @transform_3(%arg0: i32) -> (i32, i32) {
    %c0_i32 = arith.constant 0 : i32
    %c0_i32_0 = arith.constant 0 : i32
    %c0_i32_1 = arith.constant 0 : i32
    return %c0_i32, %c0_i32_0 : i32, i32
  }
  func.func @transform_4(%arg0: i32) -> (i32, i32) {
    %c0_i32 = arith.constant 0 : i32
    %c0_i32_0 = arith.constant 0 : i32
    %c0_i32_1 = arith.constant 0 : i32
    return %c0_i32, %c0_i32_0 : i32, i32
  }
}

</mosaic_0001>

<llo_original>
// kernel: tpu_custom_call.1
$region0: #{tpu_custom_call.1}
  #allocation0 [shape = 'u32[]', space=smem, size = 0x4, offset = 0x4, fixed_abs, tag = 'smem constant byte address 0x4 - core index']
  #allocation1 [shape = 'u32[72,128]{1,0:T(1,128)}', space=vmem, size = 0x9000, scoped, tag = 'internal scratch']
  #allocation2 [shape = 'f32[1,1024]{1,0:T(1,128)}', space=vmem, size = 0x1000, scoped, tag = 'scratch operand']
  #allocation3 [shape = 'f32[1,1]{1,0:T(1,128)S(6)}', space=smem, size = 0x200, scoped, tag = 'scoped memory for tpu_custom_call.1']
  %s0 = inlined_call_operand.hbm [shape: f32[200,1024], index: 0, kind: input, shape index: {}]
  %s1 = inlined_call_operand.hbm [shape: f32[1,1024], index: 1, kind: input, shape index: {}]
  %s2 = inlined_call_operand.<no memory space> [shape: f32[1,1], index: 2, kind: input, shape index: {}]
  %s3 = inlined_call_operand.hbm [shape: f32[1,1], index: 3, kind: output, shape index: {0}]
  %s4 = inlined_call_operand.hbm [shape: f32[1,1], index: 4, kind: output, shape index: {1}]
  %5 = xla_tuple %s3, %s4
  %s6 = sld [smem:[#allocation0]]
  $region73: #{tpu_custom_call.1} parent=0
    _
  %s8 = ssub.s32 1, %s6
  %s9 = scalar_select 0, %s8, %s6
  %10 = sst [smem:[#allocation3]] %s2
  $region1: #{tpu_custom_call.1} parent=0
    #allocation4 [shape = 'u8[524288]{0}', space=vmem, size = 0x80000, scoped, tag = 'input window, operand 0']
    #allocation5 [shape = 's32[2]{0}', space=sflag, size = 0x8, scoped, tag = 'scoped memory for tpu_custom_call.1']
    #allocation6 [shape = 's32[2]{0}', space=sflag, size = 0x8, scoped, tag = 'scoped memory for tpu_custom_call.1']
    #allocation7 [shape = 'u8[4096]{0}', space=vmem, size = 0x1000, scoped, tag = 'input window, operand 1, single buffered']
    #allocation8 [shape = 's32[1]{0}', space=sflag, size = 0x4, scoped, tag = 'scoped memory for tpu_custom_call.1']
    #allocation9 [shape = 'u8[512]{0}', space=vmem, size = 0x400, scoped, tag = 'output window, operand 0, single buffered']
    #allocation10 [shape = 'u8[512]{0}', space=vmem, size = 0x400, scoped, tag = 'output window, operand 1, single buffered']
    #allocation11 [shape = 's32[1]{0}', space=sflag, size = 0x4, scoped, tag = 'scoped memory for tpu_custom_call.1']
    %11 = vsyncpa [#allocation5], 0
    %s12 = scalar_lea.sflag [#allocation5], 1
    %13 = vsyncpa %s12, 0
    %14 = vsyncpa [#allocation8], 0
    %15 = vsyncpa [#allocation6], 0
    %16 = vsyncpa [#allocation11], 0
    loop: start=0, step=1, limit=6
    $region2: #{tpu_custom_call.1} parent=1 // loop_pre_header
      _
    $region3: #{tpu_custom_call.1} parent=1 // loop_header
      %s18 = sphi 0, %s22
      %p19 = scmp.ge.s32.totalorder %s18, 6
      %s28 = sphi 0, %s30
      %s31 = sphi 0, %s28
      %s32 = sphi 0, %s31
      %s48 = sphi 0, %s32
      %s52 = sphi 0, %s52
      %s54 = sphi 0, %s52
      %s55 = sphi 0, %s54
      %s69 = sphi 0, %s55
      %s73 = sphi 0, %s73
      %s75 = sphi 0, %s73
      %s76 = sphi 0, %s75
      %s90 = sphi 0, %s76
      %s94 = sphi 0, %s94
      %s96 = sphi 0, %s94
      %s97 = sphi 0, %s96
      %s111 = sphi 0, %s97
      %s115 = sphi 0, %s115
      %s117 = sphi 0, %s115
      %s118 = sphi 0, %s117
      %s132 = sphi 0, %s118
    $region4: #{tpu_custom_call.1} parent=1 // loop_header_branch
      %21 = sbr.rel (%p19) target = $region8
    $region5: #{tpu_custom_call.1} parent=1 // loop_body
      %s23 = ssub.s32 %s18, 1
      %s24 = ssub.s32 %s18, 2
      %s25 = sadd.s32 %s18, 1
      %s26 = ssub.s32 %s18, %s25
      %p27 = scmp.eq.s32.totalorder %s26, 0
      %s29 = sadd.s32 %s28, 1
      %s30 = scalar_select %p27, %s28, %s29
      %p33 = pneg %p27
      %p34 = scmp.eq.s32.totalorder %s18, 3
      %p35 = por %p33, %p34
      %p36 = scmp.ne.s32.totalorder %s28, %s31
      %p37 = scmp.eq.s32.totalorder %s18, 0
      %p38 = por %p36, %p37
      %p39 = scmp.ne.s32.totalorder %s28, %s31
      %p40 = scmp.eq.s32.totalorder %s23, 3
      %p41 = por %p39, %p40
      %p42 = scmp.ne.s32.totalorder %s31, %s32
      %p43 = scmp.eq.s32.totalorder %s23, 0
      %p44 = por %p42, %p43
      %p45 = scmp.ne.s32.totalorder %s31, %s32
      %p46 = scmp.eq.s32.totalorder %s24, 3
      %p47 = por %p45, %p46
      %p49 = scmp.ne.s32.totalorder %s32, %s48
      %p50 = scmp.eq.s32.totalorder %s24, 0
      %p51 = por %p49, %p50
      %s53 = sadd.s32 %s52, 1
      %p56 = scmp.eq.s32.totalorder %s18, 3
      %p57 = scmp.ne.s32.totalorder %s52, %s54
      %p58 = scmp.eq.s32.totalorder %s18, 0
      %p59 = por %p57, %p58
      %p60 = scmp.ne.s32.totalorder %s52, %s54
      %p61 = scmp.eq.s32.totalorder %s23, 3
      %p62 = por %p60, %p61
      %p63 = scmp.ne.s32.totalorder %s54, %s55
      %p64 = scmp.eq.s32.totalorder %s23, 0
      %p65 = por %p63, %p64
      %p66 = scmp.ne.s32.totalorder %s54, %s55
      %p67 = scmp.eq.s32.totalorder %s24, 3
      %p68 = por %p66, %p67
      %p70 = scmp.ne.s32.totalorder %s55, %s69
      %p71 = scmp.eq.s32.totalorder %s24, 0
      %p72 = por %p70, %p71
      %s74 = sadd.s32 %s73, 1
      %p77 = scmp.eq.s32.totalorder %s18, 3
      %p78 = scmp.ne.s32.totalorder %s73, %s75
      %p79 = scmp.eq.s32.totalorder %s18, 0
      %p80 = por %p78, %p79
      %p81 = scmp.ne.s32.totalorder %s73, %s75
      %p82 = scmp.eq.s32.totalorder %s23, 3
      %p83 = por %p81, %p82
      %p84 = scmp.ne.s32.totalorder %s75, %s76
      %p85 = scmp.eq.s32.totalorder %s23, 0
      %p86 = por %p84, %p85
      %p87 = scmp.ne.s32.totalorder %s75, %s76
      %p88 = scmp.eq.s32.totalorder %s24, 3
      %p89 = por %p87, %p88
      %p91 = scmp.ne.s32.totalorder %s76, %s90
      %p92 = scmp.eq.s32.totalorder %s24, 0
      %p93 = por %p91, %p92
      %s95 = sadd.s32 %s94, 1
      %p98 = scmp.eq.s32.totalorder %s18, 3
      %p99 = scmp.ne.s32.totalorder %s94, %s96
      %p100 = scmp.eq.s32.totalorder %s18, 0
      %p101 = por %p99, %p100
      %p102 = scmp.ne.s32.totalorder %s94, %s96
      %p103 = scmp.eq.s32.totalorder %s23, 3
      %p104 = por %p102, %p103
      %p105 = scmp.ne.s32.totalorder %s96, %s97
      %p106 = scmp.eq.s32.totalorder %s23, 0
      %p107 = por %p105, %p106
      %p108 = scmp.ne.s32.totalorder %s96, %s97
      %p109 = scmp.eq.s32.totalorder %s24, 3
      %p110 = por %p108, %p109
      %p112 = scmp.ne.s32.totalorder %s97, %s111
      %p113 = scmp.eq.s32.totalorder %s24, 0
      %p114 = por %p112, %p113
      %s116 = sadd.s32 %s115, 1
      %p119 = scmp.eq.s32.totalorder %s18, 3
      %p120 = scmp.ne.s32.totalorder %s115, %s117
      %p121 = scmp.eq.s32.totalorder %s18, 0
      %p122 = por %p120, %p121
      %p123 = scmp.ne.s32.totalorder %s115, %s117
      %p124 = scmp.eq.s32.totalorder %s23, 3
      %p125 = por %p123, %p124
      %p126 = scmp.ne.s32.totalorder %s117, %s118
      %p127 = scmp.eq.s32.totalorder %s23, 0
      %p128 = por %p126, %p127
      %p129 = scmp.ne.s32.totalorder %s117, %s118
      %p130 = scmp.eq.s32.totalorder %s24, 3
      %p131 = por %p129, %p130
      %p133 = scmp.ne.s32.totalorder %s118, %s132
      %p134 = scmp.eq.s32.totalorder %s24, 0
      %p135 = por %p133, %p134
      %p136 = scmp.le.s32.totalorder 1, %s18
      %p137 = scmp.lt.s32.totalorder %s18, 5
      %p138 = pnand %p136, %p137
      %p139 = pneg %p138
      // Predicated region
      $region9: #{tpu_custom_call.1} parent=5 // pred_check
        _
      $region10: #{tpu_custom_call.1} parent=5 // pred_check_branch
        %141 = sbr.rel (%p138) target = $region12
      $region11: #{tpu_custom_call.1} parent=5 // pred_region
        %s142 = ssub.s32 %s18, 1
        // Predicated region
        $region13: #{tpu_custom_call.1} parent=11 // pred_check
          %p143 = pneg %p65
        $region14: #{tpu_custom_call.1} parent=11 // pred_check_branch
          %145 = sbr.rel (%p143) target = $region16
        $region15: #{tpu_custom_call.1} parent=11 // pred_region
          %147 = vsyncadd [#allocation8], 0
          %s149 = sshll.u32 %s1, 4
          %s150 = int_to_ptr.hbm [resolvable:$true] %s149
          %s151 = sshll.u32 [#allocation7], 4
          %s152 = int_to_ptr.vmem [resolvable:$true] %s151
          %154 = dma.hbm_to_vmem [thread:$0]  %s150, 128, %s152, [#allocation8]
        $region16: #{tpu_custom_call.1} parent=11 // pred_fallthru
          _
        // Predicated region
        $region17: #{tpu_custom_call.1} parent=11 // pred_check
          %p155 = pneg %p86
        $region18: #{tpu_custom_call.1} parent=11 // pred_check_branch
          %157 = sbr.rel (%p155) target = $region20
        $region19: #{tpu_custom_call.1} parent=11 // pred_region
          _
        $region20: #{tpu_custom_call.1} parent=11 // pred_fallthru
          _
      $region12: #{tpu_custom_call.1} parent=5 // pred_fallthru
        _
      %p158 = scmp.lt.s32.totalorder %s18, 4
      // Predicated region
      $region21: #{tpu_custom_call.1} parent=5 // pred_check
        %p159 = pneg %p158
      $region22: #{tpu_custom_call.1} parent=5 // pred_check_branch
        %161 = sbr.rel (%p159) target = $region24
      $region23: #{tpu_custom_call.1} parent=5 // pred_region
        // Predicated region
        $region25: #{tpu_custom_call.1} parent=23 // pred_check
          %p162 = pneg %p38
        $region26: #{tpu_custom_call.1} parent=23 // pred_check_branch
          %164 = sbr.rel (%p162) target = $region28
        $region27: #{tpu_custom_call.1} parent=23 // pred_region
          %s165 = sand.u32 %s28, 1
          %s166 = scalar_lea.sflag [#allocation5], %s165
          %s167 = sand.u32 %s28, 1
          %s168 = smul.addr %s167, 512
          %s169 = scalar_lea.vmem [#allocation4], %s168
          %s170 = smul.u32 8, %s18
          %s171 = ssub.s32 25, %s170
          %p172 = scmp.lt.s32.totalorder %s171, 8
          %s173 = scalar_select %p172, %s171, 8
          %s174 = smul.u32 8, %s173
          %s175 = smul.u32 %s174, 8
          %s176 = ssub.s32 512, %s175
          %s177 = sshll.u32 %s176, 4
          %178 = vsyncadd %s166, %s177
          %p179 = scmp.ne.s32.totalorder 0, %s175
          %s180 = smul.addr %s170, 8
          %s181 = smul.addr %s180, 8
          %s182 = scalar_lea.hbm %s0, %s181
          %s183 = smul.u32 64, %s173
          %s184 = sshll.u32 %s182, 4
          %s185 = int_to_ptr.hbm [resolvable:$true] %s184
          %s186 = sshll.u32 %s169, 4
          %s187 = int_to_ptr.vmem [resolvable:$true] %s186
          %s188 = sshll.u32 %s183, 4
          %192 = dma.hbm_to_vmem [thread:$0]  (%p179), %s185, %s188, %s187, %s166, 1024, 1024, 64
        $region28: #{tpu_custom_call.1} parent=23 // pred_fallthru
          _
      $region24: #{tpu_custom_call.1} parent=5 // pred_fallthru
        _
      %p193 = scmp.le.s32.totalorder 1, %s18
      %p194 = scmp.lt.s32.totalorder %s18, 5
      %p195 = pnand %p193, %p194
      %p196 = pneg %p195
      // Predicated region
      $region29: #{tpu_custom_call.1} parent=5 // pred_check
        _
      $region30: #{tpu_custom_call.1} parent=5 // pred_check_branch
        %198 = sbr.rel (%p195) target = $region32
      $region31: #{tpu_custom_call.1} parent=5 // pred_region
        %s199 = ssub.s32 %s18, 1
        %s200 = sand.u32 %s31, 1
        %s201 = scalar_lea.sflag [#allocation5], %s200
        %s202 = sand.u32 %s31, 1
        %s203 = smul.addr %s202, 512
        %s204 = scalar_lea.vmem [#allocation4], %s203
        // Predicated region
        $region33: #{tpu_custom_call.1} parent=31 // pred_check
          %p205 = pneg %p44
        $region34: #{tpu_custom_call.1} parent=31 // pred_check_branch
          %207 = sbr.rel (%p205) target = $region36
        $region35: #{tpu_custom_call.1} parent=31 // pred_region
          %209 = dma.done %s201, 8192
        $region36: #{tpu_custom_call.1} parent=31 // pred_fallthru
          _
        // Predicated region
        $region37: #{tpu_custom_call.1} parent=31 // pred_check
          %p210 = pneg %p65
        $region38: #{tpu_custom_call.1} parent=31 // pred_check_branch
          %212 = sbr.rel (%p210) target = $region40
        $region39: #{tpu_custom_call.1} parent=31 // pred_region
          %214 = dma.done [#allocation8], 128
        $region40: #{tpu_custom_call.1} parent=31 // pred_fallthru
          _
        %s215 = sand.u32 %s31, 1
        %s216 = scalar_lea.sflag [#allocation5], %s215
        %s217 = sand.u32 %s31, 1
        %s218 = smul.addr %s217, 512
        %s219 = scalar_lea.vmem [#allocation4], %s218
        %p220 = pneg %p44
        %p221 = pneg %p41
        %p222 = pneg %p65
        %p223 = pneg %p62
        %p224 = pneg %p86
        %p225 = pneg %p83
        %p226 = pneg %p107
        %p227 = pneg %p104
        %p228 = pneg %p128
        %p229 = pneg %p125
        %s230 = smul.u32 8, %s23
        %s231 = ssub.s32 25, %s230
        %p232 = scmp.lt.s32.totalorder %s231, 8
        %s233 = scalar_select %p232, %s231, 8
        %s234 = smul.u32 8, %s233
        %s235 = smul.u32 %s234, 8
        %p236 = scmp.eq.s32.totalorder %s23, 0
        // Predicated region
        $region41: #{tpu_custom_call.1} parent=31 // pred_check
          %p237 = pneg %p236
        $region42: #{tpu_custom_call.1} parent=31 // pred_check_branch
          %239 = sbr.rel (%p237) target = $region44
        $region43: #{tpu_custom_call.1} parent=31 // pred_region
          %240 = vst [vmem:[#allocation2] sm:$0xff] -inf
        $region44: #{tpu_custom_call.1} parent=31 // pred_fallthru
          _
        %p241 = scmp.ne.s32.totalorder %s23, 3
        // Predicated region
        $region45: #{tpu_custom_call.1} parent=31 // pred_check
          %p242 = pneg %p241
        $region46: #{tpu_custom_call.1} parent=31 // pred_check_branch
          %244 = sbr.rel (%p242) target = $region48
        $region47: #{tpu_custom_call.1} parent=31 // pred_region
          %v245 = vld [vmem:[%s204] sm:$0xff]
          %v246 = vld [vmem:[%s204 + $0x8] sm:$0xff]
          %v247 = vld [vmem:[%s204 + $0x10] sm:$0xff]
          %v248 = vld [vmem:[%s204 + $0x18] sm:$0xff]
          %v249 = vld [vmem:[%s204 + $0x20] sm:$0xff]
          %v250 = vld [vmem:[%s204 + $0x28] sm:$0xff]
          %v251 = vld [vmem:[%s204 + $0x30] sm:$0xff]
          %v252 = vld [vmem:[%s204 + $0x38] sm:$0xff]
          %v253 = vld [vmem:[%s204 + $0x40] sm:$0xff]
          %v254 = vld [vmem:[%s204 + $0x48] sm:$0xff]
          %v255 = vld [vmem:[%s204 + $0x50] sm:$0xff]
          %v256 = vld [vmem:[%s204 + $0x58] sm:$0xff]
          %v257 = vld [vmem:[%s204 + $0x60] sm:$0xff]
          %v258 = vld [vmem:[%s204 + $0x68] sm:$0xff]
          %v259 = vld [vmem:[%s204 + $0x70] sm:$0xff]
          %v260 = vld [vmem:[%s204 + $0x78] sm:$0xff]
          %v261 = vld [vmem:[%s204 + $0x80] sm:$0xff]
          %v262 = vld [vmem:[%s204 + $0x88] sm:$0xff]
          %v263 = vld [vmem:[%s204 + $0x90] sm:$0xff]
          %v264 = vld [vmem:[%s204 + $0x98] sm:$0xff]
          %v265 = vld [vmem:[%s204 + $0xa0] sm:$0xff]
          %v266 = vld [vmem:[%s204 + $0xa8] sm:$0xff]
          %v267 = vld [vmem:[%s204 + $0xb0] sm:$0xff]
          %v268 = vld [vmem:[%s204 + $0xb8] sm:$0xff]
          %v269 = vld [vmem:[%s204 + $0xc0] sm:$0xff]
          %v270 = vld [vmem:[%s204 + $0xc8] sm:$0xff]
          %v271 = vld [vmem:[%s204 + $0xd0] sm:$0xff]
          %v272 = vld [vmem:[%s204 + $0xd8] sm:$0xff]
          %v273 = vld [vmem:[%s204 + $0xe0] sm:$0xff]
          %v274 = vld [vmem:[%s204 + $0xe8] sm:$0xff]
          %v275 = vld [vmem:[%s204 + $0xf0] sm:$0xff]
          %v276 = vld [vmem:[%s204 + $0xf8] sm:$0xff]
          %v277 = vld [vmem:[%s204 + $0x100] sm:$0xff]
          %v278 = vld [vmem:[%s204 + $0x108] sm:$0xff]
          %v279 = vld [vmem:[%s204 + $0x110] sm:$0xff]
          %v280 = vld [vmem:[%s204 + $0x118] sm:$0xff]
          %v281 = vld [vmem:[%s204 + $0x120] sm:$0xff]
          %v282 = vld [vmem:[%s204 + $0x128] sm:$0xff]
          %v283 = vld [vmem:[%s204 + $0x130] sm:$0xff]
          %v284 = vld [vmem:[%s204 + $0x138] sm:$0xff]
          %v285 = vld [vmem:[%s204 + $0x140] sm:$0xff]
          %v286 = vld [vmem:[%s204 + $0x148] sm:$0xff]
          %v287 = vld [vmem:[%s204 + $0x150] sm:$0xff]
          %v288 = vld [vmem:[%s204 + $0x158] sm:$0xff]
          %v289 = vld [vmem:[%s204 + $0x160] sm:$0xff]
          %v290 = vld [vmem:[%s204 + $0x168] sm:$0xff]
          %v291 = vld [vmem:[%s204 + $0x170] sm:$0xff]
          %v292 = vld [vmem:[%s204 + $0x178] sm:$0xff]
          %v293 = vld [vmem:[%s204 + $0x180] sm:$0xff]
          %v294 = vld [vmem:[%s204 + $0x188] sm:$0xff]
          %v295 = vld [vmem:[%s204 + $0x190] sm:$0xff]
          %v296 = vld [vmem:[%s204 + $0x198] sm:$0xff]
          %v297 = vld [vmem:[%s204 + $0x1a0] sm:$0xff]
          %v298 = vld [vmem:[%s204 + $0x1a8] sm:$0xff]
          %v299 = vld [vmem:[%s204 + $0x1b0] sm:$0xff]
          %v300 = vld [vmem:[%s204 + $0x1b8] sm:$0xff]
          %v301 = vld [vmem:[%s204 + $0x1c0] sm:$0xff]
          %v302 = vld [vmem:[%s204 + $0x1c8] sm:$0xff]
          %v303 = vld [vmem:[%s204 + $0x1d0] sm:$0xff]
          %v304 = vld [vmem:[%s204 + $0x1d8] sm:$0xff]
          %v305 = vld [vmem:[%s204 + $0x1e0] sm:$0xff]
          %v306 = vld [vmem:[%s204 + $0x1e8] sm:$0xff]
          %v307 = vld [vmem:[%s204 + $0x1f0] sm:$0xff]
          %v308 = vld [vmem:[%s204 + $0x1f8] sm:$0xff]
          %v309 = vmax.f32 %v245, %v253
          %v310 = vmax.f32 %v309, %v261
          %v311 = vmax.f32 %v310, %v269
          %v312 = vmax.f32 %v311, %v277
          %v313 = vmax.f32 %v312, %v285
          %v314 = vmax.f32 %v313, %v293
          %v315 = vmax.f32 %v314, %v301
          %v316 = vrot.slane %v315, 4
          %v317 = vmax.f32 %v315, %v316
          %v318 = vrot.slane %v317, 2
          %v319 = vmax.f32 %v317, %v318
          %v320 = vrot.slane %v319, 1
          %v321 = vmax.f32 %v319, %v320
          %v322 = vmax.f32 %v246, %v254
          %v323 = vmax.f32 %v322, %v262
          %v324 = vmax.f32 %v323, %v270
          %v325 = vmax.f32 %v324, %v278
          %v326 = vmax.f32 %v325, %v286
          %v327 = vmax.f32 %v326, %v294
          %v328 = vmax.f32 %v327, %v302
          %v329 = vrot.slane %v328, 4
          %v330 = vmax.f32 %v328, %v329
          %v331 = vrot.slane %v330, 2
          %v332 = vmax.f32 %v330, %v331
          %v333 = vrot.slane %v332, 1
          %v334 = vmax.f32 %v332, %v333
          %v335 = vmax.f32 %v247, %v255
          %v336 = vmax.f32 %v335, %v263
          %v337 = vmax.f32 %v336, %v271
          %v338 = vmax.f32 %v337, %v279
          %v339 = vmax.f32 %v338, %v287
          %v340 = vmax.f32 %v339, %v295
          %v341 = vmax.f32 %v340, %v303
          %v342 = vrot.slane %v341, 4
          %v343 = vmax.f32 %v341, %v342
          %v344 = vrot.slane %v343, 2
          %v345 = vmax.f32 %v343, %v344
          %v346 = vrot.slane %v345, 1
          %v347 = vmax.f32 %v345, %v346
          %v348 = vmax.f32 %v248, %v256
          %v349 = vmax.f32 %v348, %v264
          %v350 = vmax.f32 %v349, %v272
          %v351 = vmax.f32 %v350, %v280
          %v352 = vmax.f32 %v351, %v288
          %v353 = vmax.f32 %v352, %v296
          %v354 = vmax.f32 %v353, %v304
          %v355 = vrot.slane %v354, 4
          %v356 = vmax.f32 %v354, %v355
          %v357 = vrot.slane %v356, 2
          %v358 = vmax.f32 %v356, %v357
          %v359 = vrot.slane %v358, 1
          %v360 = vmax.f32 %v358, %v359
          %v361 = vmax.f32 %v249, %v257
          %v362 = vmax.f32 %v361, %v265
          %v363 = vmax.f32 %v362, %v273
          %v364 = vmax.f32 %v363, %v281
          %v365 = vmax.f32 %v364, %v289
          %v366 = vmax.f32 %v365, %v297
          %v367 = vmax.f32 %v366, %v305
          %v368 = vrot.slane %v367, 4
          %v369 = vmax.f32 %v367, %v368
          %v370 = vrot.slane %v369, 2
          %v371 = vmax.f32 %v369, %v370
          %v372 = vrot.slane %v371, 1
          %v373 = vmax.f32 %v371, %v372
          %v374 = vmax.f32 %v250, %v258
          %v375 = vmax.f32 %v374, %v266
          %v376 = vmax.f32 %v375, %v274
          %v377 = vmax.f32 %v376, %v282
          %v378 = vmax.f32 %v377, %v290
          %v379 = vmax.f32 %v378, %v298
          %v380 = vmax.f32 %v379, %v306
          %v381 = vrot.slane %v380, 4
          %v382 = vmax.f32 %v380, %v381
          %v383 = vrot.slane %v382, 2
          %v384 = vmax.f32 %v382, %v383
          %v385 = vrot.slane %v384, 1
          %v386 = vmax.f32 %v384, %v385
          %v387 = vmax.f32 %v251, %v259
          %v388 = vmax.f32 %v387, %v267
          %v389 = vmax.f32 %v388, %v275
          %v390 = vmax.f32 %v389, %v283
          %v391 = vmax.f32 %v390, %v291
          %v392 = vmax.f32 %v391, %v299
          %v393 = vmax.f32 %v392, %v307
          %v394 = vrot.slane %v393, 4
          %v395 = vmax.f32 %v393, %v394
          %v396 = vrot.slane %v395, 2
          %v397 = vmax.f32 %v395, %v396
          %v398 = vrot.slane %v397, 1
          %v399 = vmax.f32 %v397, %v398
          %v400 = vmax.f32 %v252, %v260
          %v401 = vmax.f32 %v400, %v268
          %v402 = vmax.f32 %v401, %v276
          %v403 = vmax.f32 %v402, %v284
          %v404 = vmax.f32 %v403, %v292
          %v405 = vmax.f32 %v404, %v300
          %v406 = vmax.f32 %v405, %v308
          %v407 = vrot.slane %v406, 4
          %v408 = vmax.f32 %v406, %v407
          %v409 = vrot.slane %v408, 2
          %v410 = vmax.f32 %v408, %v409
          %v411 = vrot.slane %v410, 1
          %v412 = vmax.f32 %v410, %v411
          %v413 = vld [vmem:[#allocation2] sm:$0xff]
          %v422 = vrot.slane %v334, 7
          %v423 = vrot.slane %v347, 6
          %v424 = vrot.slane %v360, 5
          %v425 = vrot.slane %v373, 4
          %v426 = vrot.slane %v386, 3
          %v427 = vrot.slane %v399, 2
          %v428 = vrot.slane %v412, 1
          %vm429 = vcmask 1040384
          %v430 = vsel %vm429, %v321, %v422
          %vm431 = vcmask 1042434
          %v432 = vsel %vm431, %v423, %v424
          %vm433 = vcmask 1041408
          %v434 = vsel %vm433, %v430, %v432
          %vm435 = vcmask 1044484
          %v436 = vsel %vm435, %v425, %v426
          %vm437 = vcmask 1046534
          %v438 = vsel %vm437, %v427, %v428
          %vm439 = vcmask 1045508
          %v440 = vsel %vm439, %v436, %v438
          %vm441 = vcmask 1043456
          %v442 = vsel %vm441, %v434, %v440
          %v444 = vmax.f32 %v413, %v442
          %445 = vst [vmem:[#allocation2] sm:$0xff] %v444
        $region48: #{tpu_custom_call.1} parent=31 // pred_fallthru
          _
        %p446 = scmp.eq.s32.totalorder %s23, 3
        // Predicated region
        $region49: #{tpu_custom_call.1} parent=31 // pred_check
          %p447 = pneg %p446
        $region50: #{tpu_custom_call.1} parent=31 // pred_check_branch
          %449 = sbr.rel (%p447) target = $region52
        $region51: #{tpu_custom_call.1} parent=31 // pred_region
          %v450 = vld [vmem:[%s204] sm:$0xff]
          %v451 = vld [vmem:[%s204 + $0x8] sm:$0xff]
          %v452 = vld [vmem:[%s204 + $0x10] sm:$0xff]
          %v453 = vld [vmem:[%s204 + $0x18] sm:$0xff]
          %v454 = vld [vmem:[%s204 + $0x20] sm:$0xff]
          %v455 = vld [vmem:[%s204 + $0x28] sm:$0xff]
          %v456 = vld [vmem:[%s204 + $0x30] sm:$0xff]
          %v457 = vld [vmem:[%s204 + $0x38] sm:$0xff]
          %v458 = vrot.slane %v450, 4
          %v459 = vmax.f32 %v450, %v458
          %v460 = vrot.slane %v459, 2
          %v461 = vmax.f32 %v459, %v460
          %v462 = vrot.slane %v461, 1
          %v463 = vmax.f32 %v461, %v462
          %v464 = vrot.slane %v451, 4
          %v465 = vmax.f32 %v451, %v464
          %v466 = vrot.slane %v465, 2
          %v467 = vmax.f32 %v465, %v466
          %v468 = vrot.slane %v467, 1
          %v469 = vmax.f32 %v467, %v468
          %v470 = vrot.slane %v452, 4
          %v471 = vmax.f32 %v452, %v470
          %v472 = vrot.slane %v471, 2
          %v473 = vmax.f32 %v471, %v472
          %v474 = vrot.slane %v473, 1
          %v475 = vmax.f32 %v473, %v474
          %v476 = vrot.slane %v453, 4
          %v477 = vmax.f32 %v453, %v476
          %v478 = vrot.slane %v477, 2
          %v479 = vmax.f32 %v477, %v478
          %v480 = vrot.slane %v479, 1
          %v481 = vmax.f32 %v479, %v480
          %v482 = vrot.slane %v454, 4
          %v483 = vmax.f32 %v454, %v482
          %v484 = vrot.slane %v483, 2
          %v485 = vmax.f32 %v483, %v484
          %v486 = vrot.slane %v485, 1
          %v487 = vmax.f32 %v485, %v486
          %v488 = vrot.slane %v455, 4
          %v489 = vmax.f32 %v455, %v488
          %v490 = vrot.slane %v489, 2
          %v491 = vmax.f32 %v489, %v490
          %v492 = vrot.slane %v491, 1
          %v493 = vmax.f32 %v491, %v492
          %v494 = vrot.slane %v456, 4
          %v495 = vmax.f32 %v456, %v494
          %v496 = vrot.slane %v495, 2
          %v497 = vmax.f32 %v495, %v496
          %v498 = vrot.slane %v497, 1
          %v499 = vmax.f32 %v497, %v498
          %v500 = vrot.slane %v457, 4
          %v501 = vmax.f32 %v457, %v500
          %v502 = vrot.slane %v501, 2
          %v503 = vmax.f32 %v501, %v502
          %v504 = vrot.slane %v503, 1
          %v505 = vmax.f32 %v503, %v504
          %v506 = vld [vmem:[#allocation2] sm:$0xff]
          %v515 = vrot.slane %v469, 7
          %v516 = vrot.slane %v475, 6
          %v517 = vrot.slane %v481, 5
          %v518 = vrot.slane %v487, 4
          %v519 = vrot.slane %v493, 3
          %v520 = vrot.slane %v499, 2
          %v521 = vrot.slane %v505, 1
          %vm522 = vcmask 1040384
          %v523 = vsel %vm522, %v463, %v515
          %vm524 = vcmask 1042434
          %v525 = vsel %vm524, %v516, %v517
          %vm526 = vcmask 1041408
          %v527 = vsel %vm526, %v523, %v525
          %vm528 = vcmask 1044484
          %v529 = vsel %vm528, %v518, %v519
          %vm530 = vcmask 1046534
          %v531 = vsel %vm530, %v520, %v521
          %vm532 = vcmask 1045508
          %v533 = vsel %vm532, %v529, %v531
          %vm534 = vcmask 1043456
          %v535 = vsel %vm534, %v527, %v533
          %v537 = vmax.f32 %v506, %v535
          %538 = vst [vmem:[#allocation2] sm:$0xff] %v537
          %v539 = vld [vmem:[#allocation2] sm:$0xff]
          %v540 = vld [vmem:[#allocation7] sm:$0xff]
          %v541 = vmul.f32 %v539, %v540
          %v543 = vperm.slane %v541, 0
          %v544 = vperm.slane %v541, 1
          %v545 = vperm.slane %v541, 2
          %v546 = vperm.slane %v541, 3
          %v547 = vperm.slane %v541, 4
          %v548 = vperm.slane %v541, 5
          %v549 = vperm.slane %v541, 6
          %v550 = vperm.slane %v541, 7
          %v559 = vsel %vm522, %v543, 0.0
          %v560 = vsel %vm522, %v544, 0.0
          %v561 = vadd.f32 %v559, %v560
          %v562 = vsel %vm522, %v545, 0.0
          %v563 = vadd.f32 %v561, %v562
          %v564 = vsel %vm522, %v546, 0.0
          %v565 = vadd.f32 %v563, %v564
          %v566 = vsel %vm522, %v547, 0.0
          %v567 = vadd.f32 %v565, %v566
          %v568 = vsel %vm522, %v548, 0.0
          %v569 = vadd.f32 %v567, %v568
          %v570 = vsel %vm522, %v549, 0.0
          %v571 = vadd.f32 %v569, %v570
          %v572 = vsel %vm522, %v550, 0.0
          %v573 = vadd.f32 %v571, %v572
          %574 = vadd.xlane.f32.xlu0 %v573
          %v575 = vpop.xlane.xlu0 %574
          %s576 = sld [smem:[#allocation3]]
          %v577 = vstv %s576
          %v578 = vadd.f32 %v575, %v577
          %v579 = vxor.u32 %v578, 2147483648
          %v580 = vmul.f32 %v579, 1.442695
          %v581 = vpow.pop %v580
          %v582 = vadd.f32 %v581, 1.0
          %v583 = vrcp.pop %v582
          %v584 = vmul.f32 %v582, %v583
          %v585 = vsub.f32 1.0, %v584
          %v586 = vmul.f32 %v583, %v585
          %v587 = vadd.f32 %v583, %v586
          %vm588 = vweird.f32 %v582
          %vm589 = vweird.f32 %v583
          %vm590 = vmor %vm588, %vm589
          %v591 = vsel %vm590, %v583, %v587
          %v592 = vand.u32 2147483647, %v582
          %vm593 = vcmp.eq.f32.partialorder %v592, 8.507059e+37
          %v594 = vand.u32 %v582, 2147483648
          %v595 = vor.u32 1.1754944e-38, %v594
          %v596 = vsel %vm593, %v595, %v591
          %v597 = vmul.f32 1.0, %v596
          %vm598 = vcmask 0
          %599 = vst.msk [vmem:[#allocation9] sm:$0x1] %vm598, %v597
          %vm600 = vcmp.ge.f32.partialorder %v597, 0.5
          %v601 = vsel %vm600, 1, 0
          %v602 = vcvt.s32.f32 %v601
          %603 = vst.msk [vmem:[#allocation10] sm:$0x1] %vm598, %v602
        $region52: #{tpu_custom_call.1} parent=31 // pred_fallthru
          _
        // Predicated region
        $region53: #{tpu_custom_call.1} parent=31 // pred_check
          %p604 = pneg %p104
        $region54: #{tpu_custom_call.1} parent=31 // pred_check_branch
          %606 = sbr.rel (%p604) target = $region56
        $region55: #{tpu_custom_call.1} parent=31 // pred_region
          %608 = vsyncadd [#allocation6], 0
          %s610 = sshll.u32 [#allocation9], 4
          %s611 = int_to_ptr.vmem [resolvable:$true] %s610
          %s612 = sshll.u32 %s3, 4
          %s613 = int_to_ptr.hbm [resolvable:$true] %s612
          %615 = dma.vmem_to_hbm [thread:$0]  %s611, 16, %s613, [#allocation6]
        $region56: #{tpu_custom_call.1} parent=31 // pred_fallthru
          _
        // Predicated region
        $region57: #{tpu_custom_call.1} parent=31 // pred_check
          %p616 = pneg %p125
        $region58: #{tpu_custom_call.1} parent=31 // pred_check_branch
          %618 = sbr.rel (%p616) target = $region60
        $region59: #{tpu_custom_call.1} parent=31 // pred_region
          %620 = vsyncadd [#allocation11], 0
          %s622 = sshll.u32 [#allocation10], 4
          %s623 = int_to_ptr.vmem [resolvable:$true] %s622
          %s624 = sshll.u32 %s4, 4
          %s625 = int_to_ptr.hbm [resolvable:$true] %s624
          %627 = dma.vmem_to_hbm [thread:$0]  %s623, 16, %s625, [#allocation11]
        $region60: #{tpu_custom_call.1} parent=31 // pred_fallthru
          _
        // Predicated region
        $region61: #{tpu_custom_call.1} parent=31 // pred_check
          %p628 = pneg %p104
        $region62: #{tpu_custom_call.1} parent=31 // pred_check_branch
          %630 = sbr.rel (%p628) target = $region64
        $region63: #{tpu_custom_call.1} parent=31 // pred_region
          %632 = dma.done [#allocation6], 16
        $region64: #{tpu_custom_call.1} parent=31 // pred_fallthru
          _
        // Predicated region
        $region65: #{tpu_custom_call.1} parent=31 // pred_check
          %p633 = pneg %p125
        $region66: #{tpu_custom_call.1} parent=31 // pred_check_branch
          %635 = sbr.rel (%p633) target = $region68
        $region67: #{tpu_custom_call.1} parent=31 // pred_region
          %637 = dma.done [#allocation11], 16
        $region68: #{tpu_custom_call.1} parent=31 // pred_fallthru
          _
      $region32: #{tpu_custom_call.1} parent=5 // pred_fallthru
        _
      %p638 = scmp.le.s32.totalorder 2, %s18
      // Predicated region
      $region69: #{tpu_custom_call.1} parent=5 // pred_check
        %p639 = pneg %p638
      $region70: #{tpu_custom_call.1} parent=5 // pred_check_branch
        %641 = sbr.rel (%p639) target = $region72
      $region71: #{tpu_custom_call.1} parent=5 // pred_region
        %s642 = ssub.s32 %s18, 2
      $region72: #{tpu_custom_call.1} parent=5 // pred_fallthru
        _
    $region6: #{tpu_custom_call.1} parent=1 // loop_footer
      %s22 = sadd.s32 1, %s18
    $region7: #{tpu_custom_call.1} parent=1 // loop_footer_branch
      %17 = sbr.rel target = $region3
    $region8: #{tpu_custom_call.1} parent=1 // loop_exit
      _
    %643 = vsyncpa [#allocation5], 1
    %s644 = scalar_lea.sflag [#allocation5], 1
    %645 = vsyncpa %s644, 1
    %646 = vsyncpa [#allocation8], 1
    %647 = vsyncpa [#allocation6], 1
    %s648 = scalar_lea.sflag [#allocation6], 1
    %649 = vsyncpa %s648, 1
    %650 = vsyncpa [#allocation11], 1

</llo_original>
